<compile_context>
chip_gen: v5e
topology: v5e:2x2
jax: 0.10.0
libtpu: 0.0.40
codegen_flags: <defaults>
</compile_context>

<pallas_src>
import jax
import jax.numpy as jnp
from jax.experimental import pallas as pl
from jax.experimental.pallas import tpu as pltpu

_HI = jax.lax.Precision.HIGHEST  # full-f32 precision for the pure-JAX references


# --------------------------------------------------------------------------- kernel

def _qcl_kernel(c_ref, ww_ref, bw_ref, out_ref):
    """One grid step = `group` independent examples.

    c_ref  : [G, Lc, H]  choice embeddings
    ww_ref : [H, H]      QAttention.W weight, transposed (so x @ ww_t == Conv1d W(x))
    bw_ref : [1, H]      QAttention.W bias
    out_ref: [G, H]      final layer output per example
    """
    c = c_ref[...]
    _, lc, _ = c.shape
    c_sum = jnp.sum(c, axis=1)                                   # [G, H] (XLU sublane sum)
    out = jnp.dot(c_sum, ww_ref[...],
                  preferred_element_type=jnp.float32)            # single MXU matmul, f32 acc
    out_ref[...] = out + jnp.float32(lc) * bw_ref[...]


# --------------------------------------------------------------------------- wrapper

def _pick_group(batch, lc, h, requested):
    """Choose the per-step batch size.

    Targets: >=2 even grid steps when possible (both v7x TensorCores busy under the
    "parallel" axis; negligible extra step overhead on single-TC v5e/v6e), a group that
    divides B exactly (no padded HBM copy of the batch), and a VMEM footprint for the
    double-buffered c block far below the smallest scoped default (16 MiB on v5e).
    """
    vmem_budget = 4 << 20                                   # budget for the c input block
    cap = max(1, vmem_budget // (2 * lc * h * 4))           # x2: double buffering
    target = requested if requested is not None else (batch if batch < 2 else -(-batch // 2))
    target = max(1, min(target, batch, cap))
    for g in range(target, 0, -1):                          # largest divisor of B <= target
        if batch % g == 0:
            if 2 * g > target:                              # close enough: no padding at all
                return g, 0
            break
    return target, (-batch) % target                        # rare fallback: pad cb only


def question_choice_layer_batched(qb, cb, params, *, group=None):
    """qb: [B, Lq, in_features], cb: [B, Lc, n_hidden]  ->  [B, n_hidden].

    The output of the original module is mathematically independent of the question
    embeddings (the column softmax cancels under the uniform Lq sum and the Qe softmax is
    over a size-1 axis); qb is kept in the signature for API parity and never DMA'd.
    """
    B = qb.shape[0]
    Bc, Lc, H = cb.shape
    assert B == Bc, (B, Bc)
    del qb  # provably unused by the forward pass (verified against the full reference)

    group, pad = _pick_group(B, Lc, H, group)
    if pad:
        # Tail fallback only; cb is the sole tensor input so this never copies qb, and it
        # is skipped entirely whenever a divisor of B close to the target exists.
        cb = jnp.concatenate([cb, jnp.zeros((pad, Lc, H), cb.dtype)], axis=0)
    n_steps = (B + pad) // group

    # One-time weight prep (tiny; fused by XLA): Conv1d weight [H_out, H_in] -> transpose.
    ww_t = params["ww"].T.astype(jnp.float32)                # [H, H]
    bw = params["bw"].reshape(1, H).astype(jnp.float32)      # [1, H]

    out = pl.pallas_call(
        _qcl_kernel,
        out_shape=jax.ShapeDtypeStruct((B + pad, H), jnp.float32),
        grid=(n_steps,),
        in_specs=[
            pl.BlockSpec((group, Lc, H), lambda i: (i, 0, 0)),
            # Constant index_maps: weights fetched once, VMEM-resident across the grid.
            pl.BlockSpec((H, H), lambda i: (0, 0)),
            pl.BlockSpec((1, H), lambda i: (0, 0)),
        ],
        out_specs=pl.BlockSpec((group, H), lambda i: (i, 0)),
        compiler_params=pltpu.CompilerParams(
            dimension_semantics=("parallel",)),              # v7x megacore; no-op on v5e/v6e
    )(cb, ww_t, bw)
    return out[:B]


def question_choice_layer(qemb, cemb, params):
    """Single-example forward matching the PyTorch module: [Lq,Fin], [Lc,H] -> [H]."""
    return question_choice_layer_batched(qemb[None], cemb[None], params, group=1)[0]


# --------------------------------------------------------------------------- references

def _reference(qemb, cemb, params):
    """Pure-JAX, HIGHEST-precision mirror of the PyTorch forward (incl. Qproj/Qe/softmax)."""
    H = params["ww"].shape[0]
    qp = jnp.dot(qemb, params["wp"].T, precision=_HI) + params["bp"]          # Qproj
    attq = jnp.dot(qp, params["ww"].T, precision=_HI) + params["bw"]
    attkv = jnp.dot(cemb, params["ww"].T, precision=_HI) + params["bw"]
    scores = jnp.dot(attq, attkv.T, precision=_HI) / jnp.sqrt(jnp.float32(H))
    attn = jax.nn.softmax(scores, axis=0)                                      # dim=0
    outputs = jnp.dot(attn, attkv, precision=_HI)                              # [Lq, H]
    e = (jnp.dot(outputs, params["we"].T, precision=_HI) + params["be"]).T     # [1, Lq]
    qattn = jax.nn.softmax(e, axis=0)                 # size-1 softmax axis -> exactly ones
    return jnp.dot(qattn, outputs, precision=_HI)[0]                           # [H]


def _reference_collapsed(cemb, params):
    """Pure-JAX HIGHEST-precision form of the algebraic collapse used by the kernel."""
    Lc = cemb.shape[0]
    return (jnp.dot(jnp.sum(cemb, axis=0), params["ww"].T, precision=_HI)
            + jnp.float32(Lc) * params["bw"])


def _init_params(key, in_features, n_hidden):
    """Deterministic Conv1d-style init (uniform +-1/sqrt(fan_in))."""
    ks = jax.random.split(key, 6)

    def u(k, shape, fan_in):
        b = 1.0 / jnp.sqrt(jnp.float32(fan_in))
        return jax.random.uniform(k, shape, jnp.float32, -b, b)

    return {
        "wp": u(ks[0], (n_hidden, in_features), in_features),   # Qproj weight [out, in]
        "bp": u(ks[1], (n_hidden,), in_features),
        "ww": u(ks[2], (n_hidden, n_hidden), n_hidden),         # QAttention.W
        "bw": u(ks[3], (n_hidden,), n_hidden),
        "we": u(ks[4], (1, n_hidden), n_hidden),                # Qe (no output effect)
        "be": u(ks[5], (1,), n_hidden),
    }


# --------------------------------------------------------------------------- demo / test

if __name__ == "__main__":
    key = jax.random.PRNGKey(0)
    k_q, k_c, k_p = jax.random.split(key, 3)

    B, Lq, Lc = 16, 8, 8
    in_features, n_hidden = 48, 32

    qb = jax.random.normal(k_q, (B, Lq, in_features), jnp.float32)
    cb = jax.random.normal(k_c, (B, Lc, n_hidden), jnp.float32)
    params = _init_params(k_p, in_features, n_hidden)

    out = question_choice_layer_batched(qb, cb, params)     # group=8 -> grid=(2,), no padding
    out = jax.block_until_ready(out)
    assert out.shape == (B, n_hidden), out.shape

    ref_full = jax.vmap(lambda q, c: _reference(q, c, params))(qb, cb)
    ref_collapsed = jax.vmap(lambda c: _reference_collapsed(c, params))(cb)

    # (1) The algebraic collapse is exact: full attention chain vs sum_c(c) @ Ww^T + Lc*bw,
    #     both pure-JAX f32 at HIGHEST precision -> agreement at ~1e-6, asserted at 1e-4.
    assert jnp.allclose(ref_full, ref_collapsed, atol=1e-4, rtol=1e-4), float(
        jnp.max(jnp.abs(ref_full - ref_collapsed)))

    # (2) Kernel vs the faithful full reference.  After (1), the only reordered arithmetic
    #     left in the kernel is a single [G,H]@[H,H] MXU matmul on the default Mosaic f32
    #     path, so the slack below only covers MXU rounding; genuine bugs (wrong weight
    #     orientation, missing bias, wrong reduction axis) would show as O(0.1-1) errors.
    assert jnp.allclose(out, ref_full, atol=1e-2, rtol=1e-2), float(
        jnp.max(jnp.abs(out - ref_full)))

    # Single-example API (matches the PyTorch module's forward signature).
    single = jax.block_until_ready(question_choice_layer(qb[0], cb[0], params))
    assert single.shape == (n_hidden,), single.shape
    assert jnp.allclose(single, ref_full[0], atol=1e-2, rtol=1e-2), float(
        jnp.max(jnp.abs(single - ref_full[0])))

    print("KERNEL_OK")
</pallas_src>

<mosaic_0001>
module attributes {stable_mosaic.version = 11 : i64} {
  func.func @_qcl_kernel(%arg0: i32, %arg1: memref<8x8x32xf32, #tpu.memory_space<vmem>>, %arg2: memref<32x32xf32, #tpu.memory_space<vmem>>, %arg3: memref<1x32xf32, #tpu.memory_space<vmem>>, %arg4: memref<8x32xf32, #tpu.memory_space<vmem>>) attributes {dimension_semantics = [#tpu.dimension_semantics<parallel>], iteration_bounds = array<i64: 2>, scalar_prefetch = 0 : i64, scratch_operands = 0 : i64, tpu.core_type = #tpu.core_type<tc>, window_params = [{transform_indices = @transform_0, window_bounds = array<i64: 8, 8, 32>}, {pipeline_mode = #tpu.pipeline_mode<synchronous>, transform_indices = @transform_1, window_bounds = array<i64: 32, 32>}, {pipeline_mode = #tpu.pipeline_mode<synchronous>, transform_indices = @transform_2, window_bounds = array<i64: 1, 32>}, {transform_indices = @transform_3, window_bounds = array<i64: 8, 32>}]} {
    %c0 = arith.constant 0 : index
    %c0_0 = arith.constant 0 : index
    %c0_1 = arith.constant 0 : index
    %0 = vector.load %arg1[%c0, %c0_0, %c0_1] : memref<8x8x32xf32, #tpu.memory_space<vmem>>, vector<8x8x32xf32>
    %cst = arith.constant dense<0.000000e+00> : vector<8x32xf32>
    %1 = vector.multi_reduction <add>, %0, %cst [1] : vector<8x8x32xf32> to vector<8x32xf32>
    %c0_2 = arith.constant 0 : index
    %c0_3 = arith.constant 0 : index
    %2 = vector.load %arg2[%c0_2, %c0_3] : memref<32x32xf32, #tpu.memory_space<vmem>>, vector<32x32xf32>
    %cst_4 = arith.constant dense<0.000000e+00> : vector<8x32xf32>
    %3 = tpu.matmul %1, %2, %cst_4 {dimension_numbers = #tpu.dot_dimension_numbers<[1], [0], [0], [1], [0, 0, 1, 1], [], []>} : vector<8x32xf32>, vector<32x32xf32>, vector<8x32xf32> -> vector<8x32xf32>
    %c0_5 = arith.constant 0 : index
    %c0_6 = arith.constant 0 : index
    %4 = vector.load %arg3[%c0_5, %c0_6] : memref<1x32xf32, #tpu.memory_space<vmem>>, vector<1x32xf32>
    %cst_7 = arith.constant 8.000000e+00 : f32
    %5 = vector.broadcast %cst_7 : f32 to vector<1x32xf32>
    %6 = arith.mulf %5, %4 : vector<1x32xf32>
    %7 = vector.broadcast %6 : vector<1x32xf32> to vector<8x32xf32>
    %8 = arith.addf %3, %7 : vector<8x32xf32>
    %c0_8 = arith.constant 0 : index
    %c0_9 = arith.constant 0 : index
    %9 = vector.load %arg4[%c0_8, %c0_9] : memref<8x32xf32, #tpu.memory_space<vmem>>, vector<8x32xf32>
    tpu.vector_store %arg4[%c0_8, %c0_9], %8 {strides = array<i32>} : memref<8x32xf32, #tpu.memory_space<vmem>>, vector<8x32xf32>,
    return
  }
  func.func @transform_0(%arg0: i32) -> (i32, i32, i32) {
    %c0_i32 = arith.constant 0 : i32
    %c0_i32_0 = arith.constant 0 : i32
    %c0_i32_1 = arith.constant 0 : i32
    return %arg0, %c0_i32, %c0_i32_0 : i32, i32, i32
  }
  func.func @transform_1(%arg0: i32) -> (i32, i32) {
    %c0_i32 = arith.constant 0 : i32
    %c0_i32_0 = arith.constant 0 : i32
    %c0_i32_1 = arith.constant 0 : i32
    return %c0_i32, %c0_i32_0 : i32, i32
  }
  func.func @transform_2(%arg0: i32) -> (i32, i32) {
    %c0_i32 = arith.constant 0 : i32
    %c0_i32_0 = arith.constant 0 : i32
    %c0_i32_1 = arith.constant 0 : i32
    return %c0_i32, %c0_i32_0 : i32, i32
  }
  func.func @transform_3(%arg0: i32) -> (i32, i32) {
    %c0_i32 = arith.constant 0 : i32
    %c0_i32_0 = arith.constant 0 : i32
    return %arg0, %c0_i32 : i32, i32
  }
}

</mosaic_0001>

<llo_original>
// kernel: tpu_custom_call.1
$region0: #{tpu_custom_call.1}
  #allocation0 [shape = 'u32[]', space=smem, size = 0x4, offset = 0x4, fixed_abs, tag = 'smem constant byte address 0x4 - core index']
  #allocation1 [shape = 'u32[72,128]{1,0:T(1,128)}', space=vmem, size = 0x9000, scoped, tag = 'internal scratch']
  %s0 = inlined_call_operand.hbm [shape: f32[16,8,32], index: 0, kind: input, shape index: {}]
  %s1 = inlined_call_operand.hbm [shape: f32[32,32], index: 1, kind: input, shape index: {}]
  %s2 = inlined_call_operand.vmem [shape: f32[1,32], index: 2, kind: input, shape index: {}]
  %s3 = inlined_call_operand.hbm [shape: f32[16,32], index: 3, kind: output, shape index: {}]
  %s4 = sld [smem:[#allocation0]]
  $region53: #{tpu_custom_call.1} parent=0
    _
  %s6 = ssub.s32 1, %s4
  %s7 = scalar_select 0, %s6, %s4
  $region1: #{tpu_custom_call.1} parent=0
    #allocation2 [shape = 'u8[65536]{0}', space=vmem, size = 0x10000, scoped, tag = 'input window, operand 0']
    #allocation3 [shape = 's32[2]{0}', space=sflag, size = 0x8, scoped, tag = 'scoped memory for tpu_custom_call.1']
    #allocation4 [shape = 's32[2]{0}', space=sflag, size = 0x8, scoped, tag = 'scoped memory for tpu_custom_call.1']
    #allocation5 [shape = 'u8[16384]{0}', space=vmem, size = 0x4000, scoped, tag = 'input window, operand 1, single buffered']
    #allocation6 [shape = 's32[1]{0}', space=sflag, size = 0x4, scoped, tag = 'scoped memory for tpu_custom_call.1']
    #allocation7 [shape = 'u8[8192]{0}', space=vmem, size = 0x2000, scoped, tag = 'output window, operand 0']
    %8 = vsyncpa [#allocation3], 0
    %s9 = scalar_lea.sflag [#allocation3], 1
    %10 = vsyncpa %s9, 0
    %11 = vsyncpa [#allocation6], 0
    %12 = vsyncpa [#allocation4], 0
    %s13 = scalar_lea.sflag [#allocation4], 1
    %14 = vsyncpa %s13, 0
    loop: start=0, step=1, limit=4
    $region2: #{tpu_custom_call.1} parent=1 // loop_pre_header
      _
    $region3: #{tpu_custom_call.1} parent=1 // loop_header
      %s16 = sphi 0, %s20
      %p17 = scmp.ge.s32.totalorder %s16, 4
      %s26 = sphi 0, %s28
      %s29 = sphi 0, %s26
      %s30 = sphi 0, %s29
      %s46 = sphi 0, %s30
      %s50 = sphi 0, %s50
      %s52 = sphi 0, %s50
      %s53 = sphi 0, %s52
      %s67 = sphi 0, %s53
      %s71 = sphi 0, %s71
      %s73 = sphi 0, %s71
      %s74 = sphi 0, %s73
      %s88 = sphi 0, %s74
      %s94 = sphi 0, %s96
      %s97 = sphi 0, %s94
      %s98 = sphi 0, %s97
      %s114 = sphi 0, %s98
    $region4: #{tpu_custom_call.1} parent=1 // loop_header_branch
      %19 = sbr.rel (%p17) target = $region8
    $region5: #{tpu_custom_call.1} parent=1 // loop_body
      %s21 = ssub.s32 %s16, 1
      %s22 = ssub.s32 %s16, 2
      %s23 = sadd.s32 %s16, 1
      %s24 = ssub.s32 %s16, %s23
      %p25 = scmp.eq.s32.totalorder %s24, 0
      %s27 = sadd.s32 %s26, 1
      %s28 = scalar_select %p25, %s26, %s27
      %p31 = pneg %p25
      %p32 = scmp.eq.s32.totalorder %s16, 1
      %p33 = por %p31, %p32
      %p34 = scmp.ne.s32.totalorder %s26, %s29
      %p35 = scmp.eq.s32.totalorder %s16, 0
      %p36 = por %p34, %p35
      %p37 = scmp.ne.s32.totalorder %s26, %s29
      %p38 = scmp.eq.s32.totalorder %s21, 1
      %p39 = por %p37, %p38
      %p40 = scmp.ne.s32.totalorder %s29, %s30
      %p41 = scmp.eq.s32.totalorder %s21, 0
      %p42 = por %p40, %p41
      %p43 = scmp.ne.s32.totalorder %s29, %s30
      %p44 = scmp.eq.s32.totalorder %s22, 1
      %p45 = por %p43, %p44
      %p47 = scmp.ne.s32.totalorder %s30, %s46
      %p48 = scmp.eq.s32.totalorder %s22, 0
      %p49 = por %p47, %p48
      %s51 = sadd.s32 %s50, 1
      %p54 = scmp.eq.s32.totalorder %s16, 1
      %p55 = scmp.ne.s32.totalorder %s50, %s52
      %p56 = scmp.eq.s32.totalorder %s16, 0
      %p57 = por %p55, %p56
      %p58 = scmp.ne.s32.totalorder %s50, %s52
      %p59 = scmp.eq.s32.totalorder %s21, 1
      %p60 = por %p58, %p59
      %p61 = scmp.ne.s32.totalorder %s52, %s53
      %p62 = scmp.eq.s32.totalorder %s21, 0
      %p63 = por %p61, %p62
      %p64 = scmp.ne.s32.totalorder %s52, %s53
      %p65 = scmp.eq.s32.totalorder %s22, 1
      %p66 = por %p64, %p65
      %p68 = scmp.ne.s32.totalorder %s53, %s67
      %p69 = scmp.eq.s32.totalorder %s22, 0
      %p70 = por %p68, %p69
      %s72 = sadd.s32 %s71, 1
      %p75 = scmp.eq.s32.totalorder %s16, 1
      %p76 = scmp.ne.s32.totalorder %s71, %s73
      %p77 = scmp.eq.s32.totalorder %s16, 0
      %p78 = por %p76, %p77
      %p79 = scmp.ne.s32.totalorder %s71, %s73
      %p80 = scmp.eq.s32.totalorder %s21, 1
      %p81 = por %p79, %p80
      %p82 = scmp.ne.s32.totalorder %s73, %s74
      %p83 = scmp.eq.s32.totalorder %s21, 0
      %p84 = por %p82, %p83
      %p85 = scmp.ne.s32.totalorder %s73, %s74
      %p86 = scmp.eq.s32.totalorder %s22, 1
      %p87 = por %p85, %p86
      %p89 = scmp.ne.s32.totalorder %s74, %s88
      %p90 = scmp.eq.s32.totalorder %s22, 0
      %p91 = por %p89, %p90
      %s92 = ssub.s32 %s16, %s23
      %p93 = scmp.eq.s32.totalorder %s92, 0
      %s95 = sadd.s32 %s94, 1
      %s96 = scalar_select %p93, %s94, %s95
      %p99 = pneg %p93
      %p100 = scmp.eq.s32.totalorder %s16, 1
      %p101 = por %p99, %p100
      %p102 = scmp.ne.s32.totalorder %s94, %s97
      %p103 = scmp.eq.s32.totalorder %s16, 0
      %p104 = por %p102, %p103
      %p105 = scmp.ne.s32.totalorder %s94, %s97
      %p106 = scmp.eq.s32.totalorder %s21, 1
      %p107 = por %p105, %p106
      %p108 = scmp.ne.s32.totalorder %s97, %s98
      %p109 = scmp.eq.s32.totalorder %s21, 0
      %p110 = por %p108, %p109
      %p111 = scmp.ne.s32.totalorder %s97, %s98
      %p112 = scmp.eq.s32.totalorder %s22, 1
      %p113 = por %p111, %p112
      %p115 = scmp.ne.s32.totalorder %s98, %s114
      %p116 = scmp.eq.s32.totalorder %s22, 0
      %p117 = por %p115, %p116
      %p118 = scmp.le.s32.totalorder 1, %s16
      %p119 = scmp.lt.s32.totalorder %s16, 3
      %p120 = pnand %p118, %p119
      %p121 = pneg %p120
      // Predicated region
      $region9: #{tpu_custom_call.1} parent=5 // pred_check
        _
      $region10: #{tpu_custom_call.1} parent=5 // pred_check_branch
        %123 = sbr.rel (%p120) target = $region12
      $region11: #{tpu_custom_call.1} parent=5 // pred_region
        %s124 = ssub.s32 %s16, 1
        // Predicated region
        $region13: #{tpu_custom_call.1} parent=11 // pred_check
          %p125 = pneg %p63
        $region14: #{tpu_custom_call.1} parent=11 // pred_check_branch
          %127 = sbr.rel (%p125) target = $region16
        $region15: #{tpu_custom_call.1} parent=11 // pred_region
          %129 = vsyncadd [#allocation6], 0
          %s130 = sshll.u32 %s1, 4
          %s131 = int_to_ptr.hbm [resolvable:$true] %s130
          %s132 = sshll.u32 [#allocation5], 4
          %s133 = int_to_ptr.vmem [resolvable:$true] %s132
          %138 = dma.hbm_to_vmem [thread:$0]  %s131, 512, %s133, [#allocation6], 128, 128, 8
        $region16: #{tpu_custom_call.1} parent=11 // pred_fallthru
          _
        // Predicated region
        $region17: #{tpu_custom_call.1} parent=11 // pred_check
          %p139 = pneg %p84
        $region18: #{tpu_custom_call.1} parent=11 // pred_check_branch
          %141 = sbr.rel (%p139) target = $region20
        $region19: #{tpu_custom_call.1} parent=11 // pred_region
          _
        $region20: #{tpu_custom_call.1} parent=11 // pred_fallthru
          _
      $region12: #{tpu_custom_call.1} parent=5 // pred_fallthru
        _
      %p142 = scmp.lt.s32.totalorder %s16, 2
      // Predicated region
      $region21: #{tpu_custom_call.1} parent=5 // pred_check
        %p143 = pneg %p142
      $region22: #{tpu_custom_call.1} parent=5 // pred_check_branch
        %145 = sbr.rel (%p143) target = $region24
      $region23: #{tpu_custom_call.1} parent=5 // pred_region
        // Predicated region
        $region25: #{tpu_custom_call.1} parent=23 // pred_check
          %p146 = pneg %p36
        $region26: #{tpu_custom_call.1} parent=23 // pred_check_branch
          %148 = sbr.rel (%p146) target = $region28
        $region27: #{tpu_custom_call.1} parent=23 // pred_region
          %s149 = sand.u32 %s26, 1
          %s150 = scalar_lea.sflag [#allocation3], %s149
          %s151 = sand.u32 %s26, 1
          %s152 = smul.addr %s151, 64
          %s153 = scalar_lea.vmem [#allocation2], %s152
          %s154 = smul.u32 8, %s16
          %156 = vsyncadd %s150, 0
          %s157 = smul.addr %s154, 8
          %s158 = scalar_lea.hbm %s0, %s157
          %s159 = sshll.u32 %s158, 4
          %s160 = int_to_ptr.hbm [resolvable:$true] %s159
          %s161 = sshll.u32 %s153, 4
          %s162 = int_to_ptr.vmem [resolvable:$true] %s161
          %167 = dma.hbm_to_vmem [thread:$0]  %s160, 1024, %s162, %s150, 128, 128, 8
        $region28: #{tpu_custom_call.1} parent=23 // pred_fallthru
          _
      $region24: #{tpu_custom_call.1} parent=5 // pred_fallthru
        _
      %p168 = scmp.le.s32.totalorder 1, %s16
      %p169 = scmp.lt.s32.totalorder %s16, 3
      %p170 = pnand %p168, %p169
      %p171 = pneg %p170
      // Predicated region
      $region29: #{tpu_custom_call.1} parent=5 // pred_check
        _
      $region30: #{tpu_custom_call.1} parent=5 // pred_check_branch
        %173 = sbr.rel (%p170) target = $region32
      $region31: #{tpu_custom_call.1} parent=5 // pred_region
        %s174 = ssub.s32 %s16, 1
        %s175 = sand.u32 %s29, 1
        %s176 = scalar_lea.sflag [#allocation3], %s175
        %s177 = sand.u32 %s29, 1
        %s178 = smul.addr %s177, 64
        %s179 = scalar_lea.vmem [#allocation2], %s178
        // Predicated region
        $region33: #{tpu_custom_call.1} parent=31 // pred_check
          %p180 = pneg %p42
        $region34: #{tpu_custom_call.1} parent=31 // pred_check_branch
          %182 = sbr.rel (%p180) target = $region36
        $region35: #{tpu_custom_call.1} parent=31 // pred_region
          %184 = dma.done %s176, 1024
        $region36: #{tpu_custom_call.1} parent=31 // pred_fallthru
          _
        // Predicated region
        $region37: #{tpu_custom_call.1} parent=31 // pred_check
          %p185 = pneg %p63
        $region38: #{tpu_custom_call.1} parent=31 // pred_check_branch
          %187 = sbr.rel (%p185) target = $region40
        $region39: #{tpu_custom_call.1} parent=31 // pred_region
          %189 = dma.done [#allocation6], 512
        $region40: #{tpu_custom_call.1} parent=31 // pred_fallthru
          _
        %s190 = sand.u32 %s29, 1
        %s191 = scalar_lea.sflag [#allocation3], %s190
        %s192 = sand.u32 %s29, 1
        %s193 = smul.addr %s192, 64
        %s194 = scalar_lea.vmem [#allocation2], %s193
        %p195 = pneg %p42
        %p196 = pneg %p39
        %p197 = pneg %p63
        %p198 = pneg %p60
        %p199 = pneg %p84
        %p200 = pneg %p81
        %p201 = pneg %p110
        %p202 = pneg %p107
        %s203 = sand.u32 %s97, 1
        %s204 = scalar_lea.sflag [#allocation4], %s203
        %s205 = sand.u32 %s97, 1
        %s206 = smul.addr %s205, 8
        %s207 = scalar_lea.vmem [#allocation7], %s206
        %s208 = smul.u32 8, %s21
        %v209 = vld [vmem:[%s179] sm:$0xff]
        %v210 = vld [vmem:[%s179 + $0x8] sm:$0xff]
        %v211 = vld [vmem:[%s179 + $0x10] sm:$0xff]
        %v212 = vld [vmem:[%s179 + $0x18] sm:$0xff]
        %v213 = vld [vmem:[%s179 + $0x20] sm:$0xff]
        %v214 = vld [vmem:[%s179 + $0x28] sm:$0xff]
        %v215 = vld [vmem:[%s179 + $0x30] sm:$0xff]
        %v216 = vld [vmem:[%s179 + $0x38] sm:$0xff]
        %vm217 = vcmask 261120
        %v218 = vsel %vm217, %v209, 0.0
        %v219 = vrot.slane %v218, 4
        %v220 = vadd.f32 %v218, %v219
        %v221 = vrot.slane %v220, 2
        %v222 = vadd.f32 %v220, %v221
        %v223 = vrot.slane %v222, 1
        %v224 = vadd.f32 %v222, %v223
        %v225 = vsel %vm217, %v210, 0.0
        %v226 = vrot.slane %v225, 4
        %v227 = vadd.f32 %v225, %v226
        %v228 = vrot.slane %v227, 2
        %v229 = vadd.f32 %v227, %v228
        %v230 = vrot.slane %v229, 1
        %v231 = vadd.f32 %v229, %v230
        %v232 = vsel %vm217, %v211, 0.0
        %v233 = vrot.slane %v232, 4
        %v234 = vadd.f32 %v232, %v233
        %v235 = vrot.slane %v234, 2
        %v236 = vadd.f32 %v234, %v235
        %v237 = vrot.slane %v236, 1
        %v238 = vadd.f32 %v236, %v237
        %v239 = vsel %vm217, %v212, 0.0
        %v240 = vrot.slane %v239, 4
        %v241 = vadd.f32 %v239, %v240
        %v242 = vrot.slane %v241, 2
        %v243 = vadd.f32 %v241, %v242
        %v244 = vrot.slane %v243, 1
        %v245 = vadd.f32 %v243, %v244
        %v246 = vsel %vm217, %v213, 0.0
        %v247 = vrot.slane %v246, 4
        %v248 = vadd.f32 %v246, %v247
        %v249 = vrot.slane %v248, 2
        %v250 = vadd.f32 %v248, %v249
        %v251 = vrot.slane %v250, 1
        %v252 = vadd.f32 %v250, %v251
        %v253 = vsel %vm217, %v214, 0.0
        %v254 = vrot.slane %v253, 4
        %v255 = vadd.f32 %v253, %v254
        %v256 = vrot.slane %v255, 2
        %v257 = vadd.f32 %v255, %v256
        %v258 = vrot.slane %v257, 1
        %v259 = vadd.f32 %v257, %v258
        %v260 = vsel %vm217, %v215, 0.0
        %v261 = vrot.slane %v260, 4
        %v262 = vadd.f32 %v260, %v261
        %v263 = vrot.slane %v262, 2
        %v264 = vadd.f32 %v262, %v263
        %v265 = vrot.slane %v264, 1
        %v266 = vadd.f32 %v264, %v265
        %v267 = vsel %vm217, %v216, 0.0
        %v268 = vrot.slane %v267, 4
        %v269 = vadd.f32 %v267, %v268
        %v270 = vrot.slane %v269, 2
        %v271 = vadd.f32 %v269, %v270
        %v272 = vrot.slane %v271, 1
        %v273 = vadd.f32 %v271, %v272
        %v274 = vld [vmem:[#allocation5] sm:$0xff]
        %v275 = vld [vmem:[#allocation5 + $0x8] sm:$0xff]
        %v276 = vld [vmem:[#allocation5 + $0x10] sm:$0xff]
        %v277 = vld [vmem:[#allocation5 + $0x18] sm:$0xff]
        %v278 = vld [vmem:[%s2] sm:$0x1]
        %v279 = vmul.f32 %v278, 8.0
        %v281 = vperm.slane %v279, 0
        %vm291 = vcmask 1041409
        %v292 = vsel %vm291, %v231, %v224
        %vm293 = vcmask 1042434
        %v294 = vsel %vm293, %v238, %v292
        %vm295 = vcmask 1043459
        %v296 = vsel %vm295, %v245, %v294
        %vm297 = vcmask 1044484
        %v298 = vsel %vm297, %v252, %v296
        %vm299 = vcmask 1045509
        %v300 = vsel %vm299, %v259, %v298
        %vm301 = vcmask 1046534
        %v302 = vsel %vm301, %v266, %v300
        %vm303 = vcmask 1047559
        %v304 = vsel %vm303, %v273, %v302
        %v305 = vsel %vm217, %v304, 0
        %307 = vmatpush.msra.mxu0 0.0
        %308 = vmatpush.msra.mxu0 0.0
        %309 = vmatpush.msra.mxu0 0.0
        %310 = vmatpush.msra.mxu0 0.0
        %311 = vmatpush.msra.mxu0 0.0
        %312 = vmatpush.msra.mxu0 0.0
        %313 = vmatpush.msra.mxu0 0.0
        %314 = vmatpush.msra.mxu0 0.0
        %315 = vmatpush.msra.mxu0 0.0
        %316 = vmatpush.msra.mxu0 0.0
        %317 = vmatpush.msra.mxu0 0.0
        %318 = vmatpush.msra.mxu0 0.0
        %319 = vmatpush.msra.mxu0 %v277
        %320 = vmatpush.msra.mxu0 %v276
        %321 = vmatpush.msra.mxu0 %v275
        %322 = vmatpush.msra.mxu0 %v274
        %323 = vmatmul.f32.gmra.mxu0 %v305
        %v324 = vpop.f32.mrf.mxu0
        %v325 = vadd.f32 %v281, %v324
        %326 = vdwg.mxu0
        %327 = vst.msk [vmem:[%s207] sm:$0xff] %vm217, %v325
        %s328 = sand.u32 %s97, 1
        %s329 = scalar_lea.sflag [#allocation4], %s328
        %s330 = sand.u32 %s97, 1
        %s331 = smul.addr %s330, 8
        %s332 = scalar_lea.vmem [#allocation7], %s331
        // Predicated region
        $region41: #{tpu_custom_call.1} parent=31 // pred_check
          %p333 = pneg %p107
        $region42: #{tpu_custom_call.1} parent=31 // pred_check_branch
          %335 = sbr.rel (%p333) target = $region44
        $region43: #{tpu_custom_call.1} parent=31 // pred_region
          %337 = vsyncadd %s329, 0
          %s338 = smul.addr %s21, 8
          %s339 = scalar_lea.hbm %s3, %s338
          %s341 = sshll.u32 %s332, 4
          %s342 = int_to_ptr.vmem [resolvable:$true] %s341
          %s343 = sshll.u32 %s339, 4
          %s344 = int_to_ptr.hbm [resolvable:$true] %s343
          %346 = dma.vmem_to_hbm [thread:$0]  %s342, 128, %s344, %s329
        $region44: #{tpu_custom_call.1} parent=31 // pred_fallthru
          _
      $region32: #{tpu_custom_call.1} parent=5 // pred_fallthru
        _
      %p347 = scmp.le.s32.totalorder 2, %s16
      // Predicated region
      $region45: #{tpu_custom_call.1} parent=5 // pred_check
        %p348 = pneg %p347
      $region46: #{tpu_custom_call.1} parent=5 // pred_check_branch
        %350 = sbr.rel (%p348) target = $region48
      $region47: #{tpu_custom_call.1} parent=5 // pred_region
        %s351 = ssub.s32 %s16, 2
        // Predicated region
        $region49: #{tpu_custom_call.1} parent=47 // pred_check
          %p352 = pneg %p113
        $region50: #{tpu_custom_call.1} parent=47 // pred_check_branch
          %354 = sbr.rel (%p352) target = $region52
        $region51: #{tpu_custom_call.1} parent=47 // pred_region
          %s355 = sand.u32 %s98, 1
          %s356 = scalar_lea.sflag [#allocation4], %s355
          %s357 = sand.u32 %s98, 1
          %s358 = smul.addr %s357, 8
          %s359 = scalar_lea.vmem [#allocation7], %s358
          %361 = dma.done %s356, 128
        $region52: #{tpu_custom_call.1} parent=47 // pred_fallthru
          _
      $region48: #{tpu_custom_call.1} parent=5 // pred_fallthru
        _
    $region6: #{tpu_custom_call.1} parent=1 // loop_footer
      %s20 = sadd.s32 1, %s16
    $region7: #{tpu_custom_call.1} parent=1 // loop_footer_branch
      %15 = sbr.rel target = $region3
    $region8: #{tpu_custom_call.1} parent=1 // loop_exit
      _
    %362 = vsyncpa [#allocation3], 1
    %s363 = scalar_lea.sflag [#allocation3], 1
    %364 = vsyncpa %s363, 1
    %365 = vsyncpa [#allocation6], 1
    %366 = vsyncpa [#allocation4], 1
    %s367 = scalar_lea.sflag [#allocation4], 1
    %368 = vsyncpa %s367, 1

</llo_original>
